<compile_context>
chip_gen: v7x
topology: tpu7x:2x2x1
jax: 0.10.0
libtpu: 0.0.40
codegen_flags: <defaults>
</compile_context>

<pallas_src>
import math

import jax
import jax.numpy as jnp
from jax.experimental import pallas as pl
from jax.experimental.pallas import tpu as pltpu

INV_SQRT2 = 1.0 / math.sqrt(2.0)


def _gelu_exact(x):
    # torch.nn.GELU() default: 0.5 * x * (1 + erf(x / sqrt(2)))
    return 0.5 * x * (1.0 + jax.lax.erf(x * INV_SQRT2))


def vit_head_kernel(x_ref, wEt_ref, bE_ref, wV_ref, bV_ref, o_ref):
    # x_ref  : (tile_rows, H)   f32  flattened (B*S) encoder hidden-state tile
    # wEt_ref: (H, E)           bf16 projection_E weight, pre-transposed
    # bE_ref : (1, E)           f32
    # wV_ref : (Vp1, E)         bf16 projection_V weight (NOT transposed)
    # bV_ref : (Vp1, 1)         f32
    # o_ref  : (Vp1, tile_rows) f32  lane-dense (transposed) logits tile
    x_bf = x_ref[...].astype(jnp.bfloat16)        # cast in VMEM right after DMA
    # projection_E: (tile_rows, H) @ (H, E), f32 accumulation on the MXU.
    y = jnp.dot(x_bf, wEt_ref[...], preferred_element_type=jnp.float32)
    y = y + bE_ref[...]
    z = _gelu_exact(y).astype(jnp.bfloat16)       # f32 GELU, bf16 operand for 2nd dot
    # projection_V, transposed so the long row axis lands on lanes:
    # (Vp1, E) x (tile_rows, E) contracting E -> (Vp1, tile_rows)
    out = jax.lax.dot_general(
        wV_ref[...], z,
        dimension_numbers=(((1,), (1,)), ((), ())),
        preferred_element_type=jnp.float32)
    o_ref[...] = (out + bV_ref[...]).astype(o_ref.dtype)


def _pick_tile_rows(R: int) -> int:
    # Prefer big lane-dense tiles, but keep >= 8 grid steps (>= 3-4 per v7x
    # TensorCore) before growing the tile.  128 is the legality floor.
    for t in (1024, 512, 256):
        if R >= 8 * t:
            return t
    return 128


def vit_simple_head(x, wE, bE, wV, bV):
    """x: (B, S, H) f32. wE: (E, H), bE: (E,), wV: (V+1, E), bV: (V+1,)."""
    B, S, H = x.shape
    E = wE.shape[0]
    Vp1 = wV.shape[0]

    R = B * S
    tile_rows = _pick_tile_rows(R)
    n_tiles = pl.cdiv(R, tile_rows)
    Rp = n_tiles * tile_rows

    # Stream x as f32 (no standalone HBM->HBM bf16 convert pass); the kernel
    # does the bf16 cast per tile in VMEM.
    x2 = x.reshape(R, H)
    if Rp != R:
        # TODO(synk): in production the upstream encoder should emit a
        # row-padded (ideally bf16) activation so this pad pass vanishes.
        x2 = jnp.pad(x2, ((0, Rp - R), (0, 0)))

    wEt = wE.T.astype(jnp.bfloat16)              # (H, E)   tiny, resident
    wVb = wV.astype(jnp.bfloat16)                # (Vp1, E) tiny, NOT transposed
    bE2 = bE.reshape(1, E).astype(jnp.float32)
    bV2 = bV.reshape(Vp1, 1).astype(jnp.float32)

    flops = 2 * R * H * E + 2 * R * E * Vp1
    bytes_accessed = (Rp * H * 4 + wEt.size * 2 + wVb.size * 2
                      + bE2.size * 4 + bV2.size * 4 + Vp1 * Rp * 4)
    cost = pl.CostEstimate(flops=flops, transcendentals=R * E,
                           bytes_accessed=bytes_accessed)

    out_t = pl.pallas_call(
        vit_head_kernel,
        out_shape=jax.ShapeDtypeStruct((Vp1, Rp), jnp.float32),
        grid_spec=pltpu.PrefetchScalarGridSpec(
            num_scalar_prefetch=0,
            grid=(n_tiles,),
            in_specs=[
                pl.BlockSpec((tile_rows, H), lambda i: (i, 0)),
                pl.BlockSpec((H, E), lambda i: (0, 0)),
                pl.BlockSpec((1, E), lambda i: (0, 0)),
                pl.BlockSpec((Vp1, E), lambda i: (0, 0)),
                pl.BlockSpec((Vp1, 1), lambda i: (0, 0)),
            ],
            out_specs=pl.BlockSpec((Vp1, tile_rows), lambda i: (0, i)),
        ),
        compiler_params=pltpu.CompilerParams(
            dimension_semantics=("parallel",),
            vmem_limit_bytes=32 * 1024 * 1024,
        ),
        cost_estimate=cost,
    )(x2, wEt, bE2, wVb, bV2)

    # Tiny (Vp1, R) result -> (B, S, Vp1); consumer-side transpose per review.
    return out_t[:, :R].T.reshape(B, S, Vp1)


def vit_simple_forward(x, wE, bE, wV, bV):
    # Mirrors ViT_Simple.forward with targets=None -> (logits, None).
    # TODO(synk): targets / CTC-loss branch not implemented in Pallas.
    return vit_simple_head(x, wE, bE, wV, bV), None


def _reference(x, wE, bE, wV, bV):
    # Pure-JAX f32 reference mirroring the PyTorch head.
    h = jnp.einsum("bsh,eh->bse", x, wE) + bE      # Linear(768 -> E)
    h = _gelu_exact(h)
    h = jnp.einsum("bse,ve->bsv", h, wV) + bV      # Linear(E -> V+1)
    return h


if __name__ == "__main__":
    # Shapes implied by the module: hidden = 768 (TrOCR ViT); small B / seq
    # for the test (multi-tile grid + row-padding path both exercised).
    B = 2
    S = 200
    H = 768
    E = 32          # projection_E output dim (small, chosen for the test)
    len_vocab = 15  # projection_V output dim = len_vocab + 1 = 16
    Vp1 = len_vocab + 1

    key = jax.random.PRNGKey(0)
    kx, kwE, kbE, kwV, kbV = jax.random.split(key, 5)

    # Deterministic init matching nn.Linear's uniform(-1/sqrt(fan_in), +...).
    x = jax.random.normal(kx, (B, S, H), dtype=jnp.float32)
    limE = 1.0 / math.sqrt(H)
    wE = jax.random.uniform(kwE, (E, H), jnp.float32, -limE, limE)
    bE = jax.random.uniform(kbE, (E,), jnp.float32, -limE, limE)
    limV = 1.0 / math.sqrt(E)
    wV = jax.random.uniform(kwV, (Vp1, E), jnp.float32, -limV, limV)
    bV = jax.random.uniform(kbV, (Vp1,), jnp.float32, -limV, limV)

    out, _ = vit_simple_forward(x, wE, bE, wV, bV)
    out = jax.block_until_ready(out)

    ref = _reference(x, wE, bE, wV, bV)
    assert out.shape == (B, S, Vp1), out.shape
    max_err = float(jnp.max(jnp.abs(out - ref)))
    # bf16 MXU operands (f32 accumulation) -> loosened tolerance vs f32 ref.
    assert jnp.allclose(out, ref, atol=2e-2, rtol=2e-2), max_err

    print("KERNEL_OK")
</pallas_src>

<mosaic_0001>
module attributes {stable_mosaic.version = 11 : i64} {
  func.func @vit_head_kernel(%arg0: i32, %arg1: memref<128x768xf32, #tpu.memory_space<vmem>>, %arg2: memref<768x32xbf16, #tpu.memory_space<vmem>>, %arg3: memref<1x32xf32, #tpu.memory_space<vmem>>, %arg4: memref<16x32xbf16, #tpu.memory_space<vmem>>, %arg5: memref<16x1xf32, #tpu.memory_space<vmem>>, %arg6: memref<16x128xf32, #tpu.memory_space<vmem>>) attributes {dimension_semantics = [#tpu.dimension_semantics<parallel>], iteration_bounds = array<i64: 4>, scalar_prefetch = 0 : i64, scratch_operands = 0 : i64, tpu.core_type = #tpu.core_type<tc>, window_params = [{transform_indices = @transform_0, window_bounds = array<i64: 128, 768>}, {pipeline_mode = #tpu.pipeline_mode<synchronous>, transform_indices = @transform_1, window_bounds = array<i64: 768, 32>}, {pipeline_mode = #tpu.pipeline_mode<synchronous>, transform_indices = @transform_2, window_bounds = array<i64: 1, 32>}, {pipeline_mode = #tpu.pipeline_mode<synchronous>, transform_indices = @transform_3, window_bounds = array<i64: 16, 32>}, {pipeline_mode = #tpu.pipeline_mode<synchronous>, transform_indices = @transform_4, window_bounds = array<i64: 16, 1>}, {transform_indices = @transform_5, window_bounds = array<i64: 16, 128>}]} {
    %c0 = arith.constant 0 : index
    %c0_0 = arith.constant 0 : index
    %0 = vector.load %arg1[%c0, %c0_0] : memref<128x768xf32, #tpu.memory_space<vmem>>, vector<128x768xf32>
    %1 = arith.truncf %0 : vector<128x768xf32> to vector<128x768xbf16>
    %c0_1 = arith.constant 0 : index
    %c0_2 = arith.constant 0 : index
    %2 = vector.load %arg2[%c0_1, %c0_2] : memref<768x32xbf16, #tpu.memory_space<vmem>>, vector<768x32xbf16>
    %cst = arith.constant dense<0.000000e+00> : vector<128x32xf32>
    %3 = tpu.matmul %1, %2, %cst {dimension_numbers = #tpu.dot_dimension_numbers<[1], [0], [0], [1], [0, 0, 1, 1], [], []>} : vector<128x768xbf16>, vector<768x32xbf16>, vector<128x32xf32> -> vector<128x32xf32>
    %c0_3 = arith.constant 0 : index
    %c0_4 = arith.constant 0 : index
    %4 = vector.load %arg3[%c0_3, %c0_4] : memref<1x32xf32, #tpu.memory_space<vmem>>, vector<1x32xf32>
    %5 = vector.broadcast %4 : vector<1x32xf32> to vector<128x32xf32>
    %6 = arith.addf %3, %5 : vector<128x32xf32>
    %cst_5 = arith.constant 5.000000e-01 : f32
    %7 = vector.broadcast %cst_5 : f32 to vector<128x32xf32>
    %8 = arith.mulf %7, %6 : vector<128x32xf32>
    %cst_6 = arith.constant 0.707106769 : f32
    %9 = vector.broadcast %cst_6 : f32 to vector<128x32xf32>
    %10 = arith.mulf %6, %9 : vector<128x32xf32>
    %11 = math.erf %10 : vector<128x32xf32>
    %cst_7 = arith.constant 1.000000e+00 : f32
    %12 = vector.broadcast %cst_7 : f32 to vector<128x32xf32>
    %13 = arith.addf %12, %11 : vector<128x32xf32>
    %14 = arith.mulf %8, %13 : vector<128x32xf32>
    %15 = arith.truncf %14 : vector<128x32xf32> to vector<128x32xbf16>
    %c0_8 = arith.constant 0 : index
    %c0_9 = arith.constant 0 : index
    %16 = vector.load %arg4[%c0_8, %c0_9] : memref<16x32xbf16, #tpu.memory_space<vmem>>, vector<16x32xbf16>
    %cst_10 = arith.constant dense<0.000000e+00> : vector<16x128xf32>
    %17 = tpu.matmul %16, %15, %cst_10 {dimension_numbers = #tpu.dot_dimension_numbers<[1], [1], [0], [0], [0, 0, 1, 0], [], []>} : vector<16x32xbf16>, vector<128x32xbf16>, vector<16x128xf32> -> vector<16x128xf32>
    %c0_11 = arith.constant 0 : index
    %c0_12 = arith.constant 0 : index
    %18 = vector.load %arg5[%c0_11, %c0_12] : memref<16x1xf32, #tpu.memory_space<vmem>>, vector<16x1xf32>
    %19 = vector.broadcast %18 : vector<16x1xf32> to vector<16x128xf32>
    %20 = arith.addf %17, %19 : vector<16x128xf32>
    %c0_13 = arith.constant 0 : index
    %c0_14 = arith.constant 0 : index
    %21 = vector.load %arg6[%c0_13, %c0_14] : memref<16x128xf32, #tpu.memory_space<vmem>>, vector<16x128xf32>
    tpu.vector_store %arg6[%c0_13, %c0_14], %20 {strides = array<i32>} : memref<16x128xf32, #tpu.memory_space<vmem>>, vector<16x128xf32>,
    return
  }
  func.func @transform_0(%arg0: i32) -> (i32, i32) {
    %c0_i32 = arith.constant 0 : i32
    %c0_i32_0 = arith.constant 0 : i32
    return %arg0, %c0_i32 : i32, i32
  }
  func.func @transform_1(%arg0: i32) -> (i32, i32) {
    %c0_i32 = arith.constant 0 : i32
    %c0_i32_0 = arith.constant 0 : i32
    %c0_i32_1 = arith.constant 0 : i32
    return %c0_i32, %c0_i32_0 : i32, i32
  }
  func.func @transform_2(%arg0: i32) -> (i32, i32) {
    %c0_i32 = arith.constant 0 : i32
    %c0_i32_0 = arith.constant 0 : i32
    %c0_i32_1 = arith.constant 0 : i32
    return %c0_i32, %c0_i32_0 : i32, i32
  }
  func.func @transform_3(%arg0: i32) -> (i32, i32) {
    %c0_i32 = arith.constant 0 : i32
    %c0_i32_0 = arith.constant 0 : i32
    %c0_i32_1 = arith.constant 0 : i32
    return %c0_i32, %c0_i32_0 : i32, i32
  }
  func.func @transform_4(%arg0: i32) -> (i32, i32) {
    %c0_i32 = arith.constant 0 : i32
    %c0_i32_0 = arith.constant 0 : i32
    %c0_i32_1 = arith.constant 0 : i32
    return %c0_i32, %c0_i32_0 : i32, i32
  }
  func.func @transform_5(%arg0: i32) -> (i32, i32) {
    %c0_i32 = arith.constant 0 : i32
    %c0_i32_0 = arith.constant 0 : i32
    return %c0_i32, %arg0 : i32, i32
  }
}

</mosaic_0001>

<llo_original>
// kernel: tpu_custom_call.1
$region0: #{tpu_custom_call.1}
  #allocation0 [shape = 'u32[]', space=smem, size = 0x4, offset = 0x4, fixed_abs, tag = 'smem constant byte address 0x4 - core index']
  #allocation1 [shape = 'u32[144,128]{1,0:T(1,128)}', space=vmem, size = 0x12000, scoped, tag = 'internal scratch']
  %s0 = inlined_call_operand.hbm [shape: f32[512,768], index: 0, kind: input, shape index: {}]
  %s1 = inlined_call_operand.vmem [shape: bf16[768,32], index: 1, kind: input, shape index: {}]
  %s2 = inlined_call_operand.hbm [shape: f32[1,32], index: 2, kind: input, shape index: {}]
  %s3 = inlined_call_operand.hbm [shape: bf16[16,32], index: 3, kind: input, shape index: {}]
  %s4 = inlined_call_operand.vmem [shape: f32[16,1], index: 4, kind: input, shape index: {}]
  %s5 = inlined_call_operand.hbm [shape: f32[16,512], index: 5, kind: output, shape index: {}]
  %s6 = sld [smem:[#allocation0]]
  $region65: #{tpu_custom_call.1} parent=0
    _
  %s8 = ssub.s32 1, %s6
  %s9 = scalar_select 0, %s8, %s6
  $region1: #{tpu_custom_call.1} parent=0
    #allocation2 [shape = 'u8[786432]{0}', space=vmem, size = 0xc0000, scoped, tag = 'input window, operand 0']
    #allocation3 [shape = 's32[2]{0}', space=sflag, size = 0x8, scoped, tag = 'scoped memory for tpu_custom_call.1']
    #allocation4 [shape = 's32[2]{0}', space=sflag, size = 0x8, scoped, tag = 'scoped memory for tpu_custom_call.1']
    #allocation5 [shape = 'u8[512]{0}', space=vmem, size = 0x400, scoped, tag = 'input window, operand 2, single buffered']
    #allocation6 [shape = 's32[1]{0}', space=sflag, size = 0x4, scoped, tag = 'scoped memory for tpu_custom_call.1']
    #allocation7 [shape = 'u8[4096]{0}', space=vmem, size = 0x1000, scoped, tag = 'input window, operand 3, single buffered']
    #allocation8 [shape = 'u8[16384]{0}', space=vmem, size = 0x4000, scoped, tag = 'output window, operand 0']
    %10 = vsyncpa [#allocation3], 0
    %s11 = scalar_lea.sflag [#allocation3], 1
    %12 = vsyncpa %s11, 0
    %13 = vsyncpa [#allocation6], 0
    %14 = vsyncpa [#allocation4], 0
    %s15 = scalar_lea.sflag [#allocation4], 1
    %16 = vsyncpa %s15, 0
    loop: start=0, step=1, limit=6
    $region2: #{tpu_custom_call.1} parent=1 // loop_pre_header
      _
    $region3: #{tpu_custom_call.1} parent=1 // loop_header
      %s18 = sphi 0, %s22
      %p19 = scmp.ge.s32.totalorder %s18, 6
      %s28 = sphi 0, %s30
      %s31 = sphi 0, %s28
      %s32 = sphi 0, %s31
      %s48 = sphi 0, %s32
      %s52 = sphi 0, %s52
      %s54 = sphi 0, %s52
      %s55 = sphi 0, %s54
      %s69 = sphi 0, %s55
      %s73 = sphi 0, %s73
      %s75 = sphi 0, %s73
      %s76 = sphi 0, %s75
      %s90 = sphi 0, %s76
      %s94 = sphi 0, %s94
      %s96 = sphi 0, %s94
      %s97 = sphi 0, %s96
      %s111 = sphi 0, %s97
      %s115 = sphi 0, %s115
      %s117 = sphi 0, %s115
      %s118 = sphi 0, %s117
      %s132 = sphi 0, %s118
      %s138 = sphi 0, %s140
      %s141 = sphi 0, %s138
      %s142 = sphi 0, %s141
      %s158 = sphi 0, %s142
    $region4: #{tpu_custom_call.1} parent=1 // loop_header_branch
      %21 = sbr.rel (%p19) target = $region8
    $region5: #{tpu_custom_call.1} parent=1 // loop_body
      %s23 = ssub.s32 %s18, 1
      %s24 = ssub.s32 %s18, 2
      %s25 = sadd.s32 %s18, 1
      %s26 = ssub.s32 %s18, %s25
      %p27 = scmp.eq.s32.totalorder %s26, 0
      %s29 = sadd.s32 %s28, 1
      %s30 = scalar_select %p27, %s28, %s29
      %p33 = pneg %p27
      %p34 = scmp.eq.s32.totalorder %s18, 3
      %p35 = por %p33, %p34
      %p36 = scmp.ne.s32.totalorder %s28, %s31
      %p37 = scmp.eq.s32.totalorder %s18, 0
      %p38 = por %p36, %p37
      %p39 = scmp.ne.s32.totalorder %s28, %s31
      %p40 = scmp.eq.s32.totalorder %s23, 3
      %p41 = por %p39, %p40
      %p42 = scmp.ne.s32.totalorder %s31, %s32
      %p43 = scmp.eq.s32.totalorder %s23, 0
      %p44 = por %p42, %p43
      %p45 = scmp.ne.s32.totalorder %s31, %s32
      %p46 = scmp.eq.s32.totalorder %s24, 3
      %p47 = por %p45, %p46
      %p49 = scmp.ne.s32.totalorder %s32, %s48
      %p50 = scmp.eq.s32.totalorder %s24, 0
      %p51 = por %p49, %p50
      %s53 = sadd.s32 %s52, 1
      %p56 = scmp.eq.s32.totalorder %s18, 3
      %p57 = scmp.ne.s32.totalorder %s52, %s54
      %p58 = scmp.eq.s32.totalorder %s18, 0
      %p59 = por %p57, %p58
      %p60 = scmp.ne.s32.totalorder %s52, %s54
      %p61 = scmp.eq.s32.totalorder %s23, 3
      %p62 = por %p60, %p61
      %p63 = scmp.ne.s32.totalorder %s54, %s55
      %p64 = scmp.eq.s32.totalorder %s23, 0
      %p65 = por %p63, %p64
      %p66 = scmp.ne.s32.totalorder %s54, %s55
      %p67 = scmp.eq.s32.totalorder %s24, 3
      %p68 = por %p66, %p67
      %p70 = scmp.ne.s32.totalorder %s55, %s69
      %p71 = scmp.eq.s32.totalorder %s24, 0
      %p72 = por %p70, %p71
      %s74 = sadd.s32 %s73, 1
      %p77 = scmp.eq.s32.totalorder %s18, 3
      %p78 = scmp.ne.s32.totalorder %s73, %s75
      %p79 = scmp.eq.s32.totalorder %s18, 0
      %p80 = por %p78, %p79
      %p81 = scmp.ne.s32.totalorder %s73, %s75
      %p82 = scmp.eq.s32.totalorder %s23, 3
      %p83 = por %p81, %p82
      %p84 = scmp.ne.s32.totalorder %s75, %s76
      %p85 = scmp.eq.s32.totalorder %s23, 0
      %p86 = por %p84, %p85
      %p87 = scmp.ne.s32.totalorder %s75, %s76
      %p88 = scmp.eq.s32.totalorder %s24, 3
      %p89 = por %p87, %p88
      %p91 = scmp.ne.s32.totalorder %s76, %s90
      %p92 = scmp.eq.s32.totalorder %s24, 0
      %p93 = por %p91, %p92
      %s95 = sadd.s32 %s94, 1
      %p98 = scmp.eq.s32.totalorder %s18, 3
      %p99 = scmp.ne.s32.totalorder %s94, %s96
      %p100 = scmp.eq.s32.totalorder %s18, 0
      %p101 = por %p99, %p100
      %p102 = scmp.ne.s32.totalorder %s94, %s96
      %p103 = scmp.eq.s32.totalorder %s23, 3
      %p104 = por %p102, %p103
      %p105 = scmp.ne.s32.totalorder %s96, %s97
      %p106 = scmp.eq.s32.totalorder %s23, 0
      %p107 = por %p105, %p106
      %p108 = scmp.ne.s32.totalorder %s96, %s97
      %p109 = scmp.eq.s32.totalorder %s24, 3
      %p110 = por %p108, %p109
      %p112 = scmp.ne.s32.totalorder %s97, %s111
      %p113 = scmp.eq.s32.totalorder %s24, 0
      %p114 = por %p112, %p113
      %s116 = sadd.s32 %s115, 1
      %p119 = scmp.eq.s32.totalorder %s18, 3
      %p120 = scmp.ne.s32.totalorder %s115, %s117
      %p121 = scmp.eq.s32.totalorder %s18, 0
      %p122 = por %p120, %p121
      %p123 = scmp.ne.s32.totalorder %s115, %s117
      %p124 = scmp.eq.s32.totalorder %s23, 3
      %p125 = por %p123, %p124
      %p126 = scmp.ne.s32.totalorder %s117, %s118
      %p127 = scmp.eq.s32.totalorder %s23, 0
      %p128 = por %p126, %p127
      %p129 = scmp.ne.s32.totalorder %s117, %s118
      %p130 = scmp.eq.s32.totalorder %s24, 3
      %p131 = por %p129, %p130
      %p133 = scmp.ne.s32.totalorder %s118, %s132
      %p134 = scmp.eq.s32.totalorder %s24, 0
      %p135 = por %p133, %p134
      %s136 = ssub.s32 %s18, %s25
      %p137 = scmp.eq.s32.totalorder %s136, 0
      %s139 = sadd.s32 %s138, 1
      %s140 = scalar_select %p137, %s138, %s139
      %p143 = pneg %p137
      %p144 = scmp.eq.s32.totalorder %s18, 3
      %p145 = por %p143, %p144
      %p146 = scmp.ne.s32.totalorder %s138, %s141
      %p147 = scmp.eq.s32.totalorder %s18, 0
      %p148 = por %p146, %p147
      %p149 = scmp.ne.s32.totalorder %s138, %s141
      %p150 = scmp.eq.s32.totalorder %s23, 3
      %p151 = por %p149, %p150
      %p152 = scmp.ne.s32.totalorder %s141, %s142
      %p153 = scmp.eq.s32.totalorder %s23, 0
      %p154 = por %p152, %p153
      %p155 = scmp.ne.s32.totalorder %s141, %s142
      %p156 = scmp.eq.s32.totalorder %s24, 3
      %p157 = por %p155, %p156
      %p159 = scmp.ne.s32.totalorder %s142, %s158
      %p160 = scmp.eq.s32.totalorder %s24, 0
      %p161 = por %p159, %p160
      %p162 = scmp.le.s32.totalorder 1, %s18
      %p163 = scmp.lt.s32.totalorder %s18, 5
      %p164 = pnand %p162, %p163
      %p165 = pneg %p164
      // Predicated region
      $region9: #{tpu_custom_call.1} parent=5 // pred_check
        _
      $region10: #{tpu_custom_call.1} parent=5 // pred_check_branch
        %167 = sbr.rel (%p164) target = $region12
      $region11: #{tpu_custom_call.1} parent=5 // pred_region
        %s168 = ssub.s32 %s18, 1
        // Predicated region
        $region13: #{tpu_custom_call.1} parent=11 // pred_check
          %p169 = pneg %p65
        $region14: #{tpu_custom_call.1} parent=11 // pred_check_branch
          %171 = sbr.rel (%p169) target = $region16
        $region15: #{tpu_custom_call.1} parent=11 // pred_region
          _
        $region16: #{tpu_custom_call.1} parent=11 // pred_fallthru
          _
        // Predicated region
        $region17: #{tpu_custom_call.1} parent=11 // pred_check
          %p172 = pneg %p86
        $region18: #{tpu_custom_call.1} parent=11 // pred_check_branch
          %174 = sbr.rel (%p172) target = $region20
        $region19: #{tpu_custom_call.1} parent=11 // pred_region
          %s176 = ssub.s32 16, 16
          %177 = vsyncadd [#allocation6], %s176
          %s179 = sshll.u32 [#allocation5], 4
          %s180 = int_to_ptr.vmem [resolvable:$true] %s179
          %182 = dma.hbm_to_vmem [thread:$0]  %s2, 16, %s180, [#allocation6]
        $region20: #{tpu_custom_call.1} parent=11 // pred_fallthru
          _
        // Predicated region
        $region21: #{tpu_custom_call.1} parent=11 // pred_check
          %p183 = pneg %p107
        $region22: #{tpu_custom_call.1} parent=11 // pred_check_branch
          %185 = sbr.rel (%p183) target = $region24
        $region23: #{tpu_custom_call.1} parent=11 // pred_region
          %s187 = ssub.s32 128, 128
          %188 = vsyncadd [#allocation6], %s187
          %s189 = sshll.u32 [#allocation7], 4
          %s190 = int_to_ptr.vmem [resolvable:$true] %s189
          %195 = dma.hbm_to_vmem [thread:$0]  %s3, 128, %s190, [#allocation6], 64, 64, 4
        $region24: #{tpu_custom_call.1} parent=11 // pred_fallthru
          _
        // Predicated region
        $region25: #{tpu_custom_call.1} parent=11 // pred_check
          %p196 = pneg %p128
        $region26: #{tpu_custom_call.1} parent=11 // pred_check_branch
          %198 = sbr.rel (%p196) target = $region28
        $region27: #{tpu_custom_call.1} parent=11 // pred_region
          _
        $region28: #{tpu_custom_call.1} parent=11 // pred_fallthru
          _
      $region12: #{tpu_custom_call.1} parent=5 // pred_fallthru
        _
      %p199 = scmp.lt.s32.totalorder %s18, 4
      // Predicated region
      $region29: #{tpu_custom_call.1} parent=5 // pred_check
        %p200 = pneg %p199
      $region30: #{tpu_custom_call.1} parent=5 // pred_check_branch
        %202 = sbr.rel (%p200) target = $region32
      $region31: #{tpu_custom_call.1} parent=5 // pred_region
        // Predicated region
        $region33: #{tpu_custom_call.1} parent=31 // pred_check
          %p203 = pneg %p38
        $region34: #{tpu_custom_call.1} parent=31 // pred_check_branch
          %205 = sbr.rel (%p203) target = $region36
        $region35: #{tpu_custom_call.1} parent=31 // pred_region
          %s206 = sand.u32 %s28, 1
          %s207 = scalar_lea.sflag [#allocation3], %s206
          %s208 = sand.u32 %s28, 1
          %s209 = smul.addr %s208, 768
          %s210 = scalar_lea.vmem [#allocation2], %s209
          %s211 = smul.u32 16, %s18
          %s213 = ssub.s32 12288, 12288
          %214 = vsyncadd %s207, %s213
          %s215 = smul.addr %s211, 6
          %s216 = smul.addr %s215, 128
          %s217 = scalar_lea.hbm %s0, %s216
          %s218 = sshll.u32 %s210, 4
          %s219 = int_to_ptr.vmem [resolvable:$true] %s218
          %224 = dma.hbm_to_vmem [thread:$0]  %s217, 12288, %s219, %s207, 768, 768, 48
        $region36: #{tpu_custom_call.1} parent=31 // pred_fallthru
          _
      $region32: #{tpu_custom_call.1} parent=5 // pred_fallthru
        _
      %p225 = scmp.le.s32.totalorder 1, %s18
      %p226 = scmp.lt.s32.totalorder %s18, 5
      %p227 = pnand %p225, %p226
      %p228 = pneg %p227
      // Predicated region
      $region37: #{tpu_custom_call.1} parent=5 // pred_check
        _
      $region38: #{tpu_custom_call.1} parent=5 // pred_check_branch
        %230 = sbr.rel (%p227) target = $region40
      $region39: #{tpu_custom_call.1} parent=5 // pred_region
        %s231 = ssub.s32 %s18, 1
        %s232 = sand.u32 %s31, 1
        %s233 = scalar_lea.sflag [#allocation3], %s232
        %s234 = sand.u32 %s31, 1
        %s235 = smul.addr %s234, 768
        %s236 = scalar_lea.vmem [#allocation2], %s235
        // Predicated region
        $region41: #{tpu_custom_call.1} parent=39 // pred_check
          %p237 = pneg %p44
        $region42: #{tpu_custom_call.1} parent=39 // pred_check_branch
          %239 = sbr.rel (%p237) target = $region44
        $region43: #{tpu_custom_call.1} parent=39 // pred_region
          %240 = dma.done %s233, 12288
        $region44: #{tpu_custom_call.1} parent=39 // pred_fallthru
          _
        // Predicated region
        $region45: #{tpu_custom_call.1} parent=39 // pred_check
          %p241 = pneg %p86
        $region46: #{tpu_custom_call.1} parent=39 // pred_check_branch
          %243 = sbr.rel (%p241) target = $region48
        $region47: #{tpu_custom_call.1} parent=39 // pred_region
          %244 = dma.done [#allocation6], 16
        $region48: #{tpu_custom_call.1} parent=39 // pred_fallthru
          _
        // Predicated region
        $region49: #{tpu_custom_call.1} parent=39 // pred_check
          %p245 = pneg %p107
        $region50: #{tpu_custom_call.1} parent=39 // pred_check_branch
          %247 = sbr.rel (%p245) target = $region52
        $region51: #{tpu_custom_call.1} parent=39 // pred_region
          %248 = dma.done [#allocation6], 128
        $region52: #{tpu_custom_call.1} parent=39 // pred_fallthru
          _
        %s249 = sand.u32 %s31, 1
        %s250 = scalar_lea.sflag [#allocation3], %s249
        %s251 = sand.u32 %s31, 1
        %s252 = smul.addr %s251, 768
        %s253 = scalar_lea.vmem [#allocation2], %s252
        %p254 = pneg %p44
        %p255 = pneg %p41
        %p256 = pneg %p65
        %p257 = pneg %p62
        %p258 = pneg %p86
        %p259 = pneg %p83
        %p260 = pneg %p107
        %p261 = pneg %p104
        %p262 = pneg %p128
        %p263 = pneg %p125
        %p264 = pneg %p154
        %p265 = pneg %p151
        %s266 = sand.u32 %s141, 1
        %s267 = scalar_lea.sflag [#allocation4], %s266
        %s268 = sand.u32 %s141, 1
        %s269 = smul.addr %s268, 16
        %s270 = scalar_lea.vmem [#allocation8], %s269
        %s271 = smul.u32 16, %s23
        %v273 = vld [vmem:[%s236] sm:$0xff]
        %v274 = vld [vmem:[%s236 + $0x8] sm:$0xff]
        %v275 = vld [vmem:[%s236 + $0x10] sm:$0xff]
        %v276 = vld [vmem:[%s236 + $0x18] sm:$0xff]
        %v277 = vld [vmem:[%s236 + $0x20] sm:$0xff]
        %v278 = vld [vmem:[%s236 + $0x28] sm:$0xff]
        %v279 = vld [vmem:[%s236 + $0x30] sm:$0xff]
        %v280 = vld [vmem:[%s236 + $0x38] sm:$0xff]
        %v281 = vld [vmem:[%s236 + $0x40] sm:$0xff]
        %v282 = vld [vmem:[%s236 + $0x48] sm:$0xff]
        %v283 = vld [vmem:[%s236 + $0x50] sm:$0xff]
        %v284 = vld [vmem:[%s236 + $0x58] sm:$0xff]
        %v285 = vld [vmem:[%s236 + $0x60] sm:$0xff]
        %v286 = vld [vmem:[%s236 + $0x68] sm:$0xff]
        %v287 = vld [vmem:[%s236 + $0x70] sm:$0xff]
        %v288 = vld [vmem:[%s236 + $0x78] sm:$0xff]
        %v289 = vld [vmem:[%s236 + $0x80] sm:$0xff]
        %v290 = vld [vmem:[%s236 + $0x88] sm:$0xff]
        %v291 = vld [vmem:[%s236 + $0x90] sm:$0xff]
        %v292 = vld [vmem:[%s236 + $0x98] sm:$0xff]
        %v293 = vld [vmem:[%s236 + $0xa0] sm:$0xff]
        %v294 = vld [vmem:[%s236 + $0xa8] sm:$0xff]
        %v295 = vld [vmem:[%s236 + $0xb0] sm:$0xff]
        %v296 = vld [vmem:[%s236 + $0xb8] sm:$0xff]
        %v297 = vld [vmem:[%s236 + $0xc0] sm:$0xff]
        %v298 = vld [vmem:[%s236 + $0xc8] sm:$0xff]
        %v299 = vld [vmem:[%s236 + $0xd0] sm:$0xff]
        %v300 = vld [vmem:[%s236 + $0xd8] sm:$0xff]
        %v301 = vld [vmem:[%s236 + $0xe0] sm:$0xff]
        %v302 = vld [vmem:[%s236 + $0xe8] sm:$0xff]
        %v303 = vld [vmem:[%s236 + $0xf0] sm:$0xff]
        %v304 = vld [vmem:[%s236 + $0xf8] sm:$0xff]
        %v305 = vld [vmem:[%s236 + $0x100] sm:$0xff]
        %v306 = vld [vmem:[%s236 + $0x108] sm:$0xff]
        %v307 = vld [vmem:[%s236 + $0x110] sm:$0xff]
        %v308 = vld [vmem:[%s236 + $0x118] sm:$0xff]
        %v309 = vld [vmem:[%s236 + $0x120] sm:$0xff]
        %v310 = vld [vmem:[%s236 + $0x128] sm:$0xff]
        %v311 = vld [vmem:[%s236 + $0x130] sm:$0xff]
        %v312 = vld [vmem:[%s236 + $0x138] sm:$0xff]
        %v313 = vld [vmem:[%s236 + $0x140] sm:$0xff]
        %v314 = vld [vmem:[%s236 + $0x148] sm:$0xff]
        %v315 = vld [vmem:[%s236 + $0x150] sm:$0xff]
        %v316 = vld [vmem:[%s236 + $0x158] sm:$0xff]
        %v317 = vld [vmem:[%s236 + $0x160] sm:$0xff]
        %v318 = vld [vmem:[%s236 + $0x168] sm:$0xff]
        %v319 = vld [vmem:[%s236 + $0x170] sm:$0xff]
        %v320 = vld [vmem:[%s236 + $0x178] sm:$0xff]
        %v321 = vld [vmem:[%s236 + $0x180] sm:$0xff]
        %v322 = vld [vmem:[%s236 + $0x188] sm:$0xff]
        %v323 = vld [vmem:[%s236 + $0x190] sm:$0xff]
        %v324 = vld [vmem:[%s236 + $0x198] sm:$0xff]
        %v325 = vld [vmem:[%s236 + $0x1a0] sm:$0xff]
        %v326 = vld [vmem:[%s236 + $0x1a8] sm:$0xff]
        %v327 = vld [vmem:[%s236 + $0x1b0] sm:$0xff]
        %v328 = vld [vmem:[%s236 + $0x1b8] sm:$0xff]
        %v329 = vld [vmem:[%s236 + $0x1c0] sm:$0xff]
        %v330 = vld [vmem:[%s236 + $0x1c8] sm:$0xff]
        %v331 = vld [vmem:[%s236 + $0x1d0] sm:$0xff]
        %v332 = vld [vmem:[%s236 + $0x1d8] sm:$0xff]
        %v333 = vld [vmem:[%s236 + $0x1e0] sm:$0xff]
        %v334 = vld [vmem:[%s236 + $0x1e8] sm:$0xff]
        %v335 = vld [vmem:[%s236 + $0x1f0] sm:$0xff]
        %v336 = vld [vmem:[%s236 + $0x1f8] sm:$0xff]
        %v337 = vld [vmem:[%s236 + $0x200] sm:$0xff]
        %v338 = vld [vmem:[%s236 + $0x208] sm:$0xff]
        %v339 = vld [vmem:[%s236 + $0x210] sm:$0xff]
        %v340 = vld [vmem:[%s236 + $0x218] sm:$0xff]
        %v341 = vld [vmem:[%s236 + $0x220] sm:$0xff]
        %v342 = vld [vmem:[%s236 + $0x228] sm:$0xff]
        %v343 = vld [vmem:[%s236 + $0x230] sm:$0xff]
        %v344 = vld [vmem:[%s236 + $0x238] sm:$0xff]
        %v345 = vld [vmem:[%s236 + $0x240] sm:$0xff]
        %v346 = vld [vmem:[%s236 + $0x248] sm:$0xff]
        %v347 = vld [vmem:[%s236 + $0x250] sm:$0xff]
        %v348 = vld [vmem:[%s236 + $0x258] sm:$0xff]
        %v349 = vld [vmem:[%s236 + $0x260] sm:$0xff]
        %v350 = vld [vmem:[%s236 + $0x268] sm:$0xff]
        %v351 = vld [vmem:[%s236 + $0x270] sm:$0xff]
        %v352 = vld [vmem:[%s236 + $0x278] sm:$0xff]
        %v353 = vld [vmem:[%s236 + $0x280] sm:$0xff]
        %v354 = vld [vmem:[%s236 + $0x288] sm:$0xff]
        %v355 = vld [vmem:[%s236 + $0x290] sm:$0xff]
        %v356 = vld [vmem:[%s236 + $0x298] sm:$0xff]
        %v357 = vld [vmem:[%s236 + $0x2a0] sm:$0xff]
        %v358 = vld [vmem:[%s236 + $0x2a8] sm:$0xff]
        %v359 = vld [vmem:[%s236 + $0x2b0] sm:$0xff]
        %v360 = vld [vmem:[%s236 + $0x2b8] sm:$0xff]
        %v361 = vld [vmem:[%s236 + $0x2c0] sm:$0xff]
        %v362 = vld [vmem:[%s236 + $0x2c8] sm:$0xff]
        %v363 = vld [vmem:[%s236 + $0x2d0] sm:$0xff]
        %v364 = vld [vmem:[%s236 + $0x2d8] sm:$0xff]
        %v365 = vld [vmem:[%s236 + $0x2e0] sm:$0xff]
        %v366 = vld [vmem:[%s236 + $0x2e8] sm:$0xff]
        %v367 = vld [vmem:[%s236 + $0x2f0] sm:$0xff]
        %v368 = vld [vmem:[%s236 + $0x2f8] sm:$0xff]
        %v369 = vpack.c.bf16 %v279, %v273
        %v370 = vpack.c.bf16 %v280, %v274
        %v371 = vpack.c.bf16 %v281, %v275
        %v372 = vpack.c.bf16 %v282, %v276
        %v373 = vpack.c.bf16 %v283, %v277
        %v374 = vpack.c.bf16 %v284, %v278
        %v375 = vpack.c.bf16 %v291, %v285
        %v376 = vpack.c.bf16 %v292, %v286
        %v377 = vpack.c.bf16 %v293, %v287
        %v378 = vpack.c.bf16 %v294, %v288
        %v379 = vpack.c.bf16 %v295, %v289
        %v380 = vpack.c.bf16 %v296, %v290
        %v381 = vpack.c.bf16 %v303, %v297
        %v382 = vpack.c.bf16 %v304, %v298
        %v383 = vpack.c.bf16 %v305, %v299
        %v384 = vpack.c.bf16 %v306, %v300
        %v385 = vpack.c.bf16 %v307, %v301
        %v386 = vpack.c.bf16 %v308, %v302
        %v387 = vpack.c.bf16 %v315, %v309
        %v388 = vpack.c.bf16 %v316, %v310
        %v389 = vpack.c.bf16 %v317, %v311
        %v390 = vpack.c.bf16 %v318, %v312
        %v391 = vpack.c.bf16 %v319, %v313
        %v392 = vpack.c.bf16 %v320, %v314
        %v393 = vpack.c.bf16 %v327, %v321
        %v394 = vpack.c.bf16 %v328, %v322
        %v395 = vpack.c.bf16 %v329, %v323
        %v396 = vpack.c.bf16 %v330, %v324
        %v397 = vpack.c.bf16 %v331, %v325
        %v398 = vpack.c.bf16 %v332, %v326
        %v399 = vpack.c.bf16 %v339, %v333
        %v400 = vpack.c.bf16 %v340, %v334
        %v401 = vpack.c.bf16 %v341, %v335
        %v402 = vpack.c.bf16 %v342, %v336
        %v403 = vpack.c.bf16 %v343, %v337
        %v404 = vpack.c.bf16 %v344, %v338
        %v405 = vpack.c.bf16 %v351, %v345
        %v406 = vpack.c.bf16 %v352, %v346
        %v407 = vpack.c.bf16 %v353, %v347
        %v408 = vpack.c.bf16 %v354, %v348
        %v409 = vpack.c.bf16 %v355, %v349
        %v410 = vpack.c.bf16 %v356, %v350
        %v411 = vpack.c.bf16 %v363, %v357
        %v412 = vpack.c.bf16 %v364, %v358
        %v413 = vpack.c.bf16 %v365, %v359
        %v414 = vpack.c.bf16 %v366, %v360
        %v415 = vpack.c.bf16 %v367, %v361
        %v416 = vpack.c.bf16 %v368, %v362
        %v417 = vld [vmem:[%s1] sm:$0xf]
        %v418 = vld [vmem:[%s1 + $0x4] sm:$0xf]
        %v419 = vld [vmem:[%s1 + $0x8] sm:$0xf]
        %v420 = vld [vmem:[%s1 + $0xc] sm:$0xf]
        %v421 = vld [vmem:[%s1 + $0x10] sm:$0xf]
        %v422 = vld [vmem:[%s1 + $0x14] sm:$0xf]
        %v423 = vld [vmem:[%s1 + $0x18] sm:$0xf]
        %v424 = vld [vmem:[%s1 + $0x1c] sm:$0xf]
        %v425 = vld [vmem:[%s1 + $0x20] sm:$0xf]
        %v426 = vld [vmem:[%s1 + $0x24] sm:$0xf]
        %v427 = vld [vmem:[%s1 + $0x28] sm:$0xf]
        %v428 = vld [vmem:[%s1 + $0x2c] sm:$0xf]
        %v429 = vld [vmem:[%s1 + $0x30] sm:$0xf]
        %v430 = vld [vmem:[%s1 + $0x34] sm:$0xf]
        %v431 = vld [vmem:[%s1 + $0x38] sm:$0xf]
        %v432 = vld [vmem:[%s1 + $0x3c] sm:$0xf]
        %v433 = vld [vmem:[%s1 + $0x40] sm:$0xf]
        %v434 = vld [vmem:[%s1 + $0x44] sm:$0xf]
        %v435 = vld [vmem:[%s1 + $0x48] sm:$0xf]
        %v436 = vld [vmem:[%s1 + $0x4c] sm:$0xf]
        %v437 = vld [vmem:[%s1 + $0x50] sm:$0xf]
        %v438 = vld [vmem:[%s1 + $0x54] sm:$0xf]
        %v439 = vld [vmem:[%s1 + $0x58] sm:$0xf]
        %v440 = vld [vmem:[%s1 + $0x5c] sm:$0xf]
        %v441 = vld [vmem:[%s1 + $0x60] sm:$0xf]
        %v442 = vld [vmem:[%s1 + $0x64] sm:$0xf]
        %v443 = vld [vmem:[%s1 + $0x68] sm:$0xf]
        %v444 = vld [vmem:[%s1 + $0x6c] sm:$0xf]
        %v445 = vld [vmem:[%s1 + $0x70] sm:$0xf]
        %v446 = vld [vmem:[%s1 + $0x74] sm:$0xf]
        %v447 = vld [vmem:[%s1 + $0x78] sm:$0xf]
        %v448 = vld [vmem:[%s1 + $0x7c] sm:$0xf]
        %v449 = vld [vmem:[%s1 + $0x80] sm:$0xf]
        %v450 = vld [vmem:[%s1 + $0x84] sm:$0xf]
        %v451 = vld [vmem:[%s1 + $0x88] sm:$0xf]
        %v452 = vld [vmem:[%s1 + $0x8c] sm:$0xf]
        %v453 = vld [vmem:[%s1 + $0x90] sm:$0xf]
        %v454 = vld [vmem:[%s1 + $0x94] sm:$0xf]
        %v455 = vld [vmem:[%s1 + $0x98] sm:$0xf]
        %v456 = vld [vmem:[%s1 + $0x9c] sm:$0xf]
        %v457 = vld [vmem:[%s1 + $0xa0] sm:$0xf]
        %v458 = vld [vmem:[%s1 + $0xa4] sm:$0xf]
        %v459 = vld [vmem:[%s1 + $0xa8] sm:$0xf]
        %v460 = vld [vmem:[%s1 + $0xac] sm:$0xf]
        %v461 = vld [vmem:[%s1 + $0xb0] sm:$0xf]
        %v462 = vld [vmem:[%s1 + $0xb4] sm:$0xf]
        %v463 = vld [vmem:[%s1 + $0xb8] sm:$0xf]
        %v464 = vld [vmem:[%s1 + $0xbc] sm:$0xf]
        %v465 = vld [vmem:[%s1 + $0xc0] sm:$0xf]
        %v466 = vld [vmem:[%s1 + $0xc4] sm:$0xf]
        %v467 = vld [vmem:[%s1 + $0xc8] sm:$0xf]
        %v468 = vld [vmem:[%s1 + $0xcc] sm:$0xf]
        %v469 = vld [vmem:[%s1 + $0xd0] sm:$0xf]
        %v470 = vld [vmem:[%s1 + $0xd4] sm:$0xf]
        %v471 = vld [vmem:[%s1 + $0xd8] sm:$0xf]
        %v472 = vld [vmem:[%s1 + $0xdc] sm:$0xf]
        %v473 = vld [vmem:[%s1 + $0xe0] sm:$0xf]
        %v474 = vld [vmem:[%s1 + $0xe4] sm:$0xf]
        %v475 = vld [vmem:[%s1 + $0xe8] sm:$0xf]
        %v476 = vld [vmem:[%s1 + $0xec] sm:$0xf]
        %v477 = vld [vmem:[%s1 + $0xf0] sm:$0xf]
        %v478 = vld [vmem:[%s1 + $0xf4] sm:$0xf]
        %v479 = vld [vmem:[%s1 + $0xf8] sm:$0xf]
        %v480 = vld [vmem:[%s1 + $0xfc] sm:$0xf]
        %v481 = vld [vmem:[%s1 + $0x100] sm:$0xf]
        %v482 = vld [vmem:[%s1 + $0x104] sm:$0xf]
        %v483 = vld [vmem:[%s1 + $0x108] sm:$0xf]
        %v484 = vld [vmem:[%s1 + $0x10c] sm:$0xf]
        %v485 = vld [vmem:[%s1 + $0x110] sm:$0xf]
        %v486 = vld [vmem:[%s1 + $0x114] sm:$0xf]
        %v487 = vld [vmem:[%s1 + $0x118] sm:$0xf]
        %v488 = vld [vmem:[%s1 + $0x11c] sm:$0xf]
        %v489 = vld [vmem:[%s1 + $0x120] sm:$0xf]
        %v490 = vld [vmem:[%s1 + $0x124] sm:$0xf]
        %v491 = vld [vmem:[%s1 + $0x128] sm:$0xf]
        %v492 = vld [vmem:[%s1 + $0x12c] sm:$0xf]
        %v493 = vld [vmem:[%s1 + $0x130] sm:$0xf]
        %v494 = vld [vmem:[%s1 + $0x134] sm:$0xf]
        %v495 = vld [vmem:[%s1 + $0x138] sm:$0xf]
        %v496 = vld [vmem:[%s1 + $0x13c] sm:$0xf]
        %v497 = vld [vmem:[%s1 + $0x140] sm:$0xf]
        %v498 = vld [vmem:[%s1 + $0x144] sm:$0xf]
        %v499 = vld [vmem:[%s1 + $0x148] sm:$0xf]
        %v500 = vld [vmem:[%s1 + $0x14c] sm:$0xf]
        %v501 = vld [vmem:[%s1 + $0x150] sm:$0xf]
        %v502 = vld [vmem:[%s1 + $0x154] sm:$0xf]
        %v503 = vld [vmem:[%s1 + $0x158] sm:$0xf]
        %v504 = vld [vmem:[%s1 + $0x15c] sm:$0xf]
        %v505 = vld [vmem:[%s1 + $0x160] sm:$0xf]
        %v506 = vld [vmem:[%s1 + $0x164] sm:$0xf]
        %v507 = vld [vmem:[%s1 + $0x168] sm:$0xf]
        %v508 = vld [vmem:[%s1 + $0x16c] sm:$0xf]
        %v509 = vld [vmem:[%s1 + $0x170] sm:$0xf]
        %v510 = vld [vmem:[%s1 + $0x174] sm:$0xf]
        %v511 = vld [vmem:[%s1 + $0x178] sm:$0xf]
        %v512 = vld [vmem:[%s1 + $0x17c] sm:$0xf]
        %v513 = vld [vmem:[#allocation5] sm:$0x1]
        %v515 = vlaneseq
        %v516 = vshrl.u32 %v515, 7
        %v517 = vsub.s32 0, %v516
        %v518 = vrot.slane %v513, %v517
        %v616 = vunpack.c.l.b16 %v417
        %v617 = vunpack.c.l.b16 %v418
        %v618 = vunpack.c.l.b16 %v419
        %v619 = vunpack.c.l.b16 %v420
        %v620 = vunpack.c.l.b16 %v421
        %v621 = vunpack.c.l.b16 %v422
        %v622 = vunpack.c.l.b16 %v423
        %v623 = vunpack.c.l.b16 %v424
        %v624 = vunpack.c.l.b16 %v425
        %v625 = vunpack.c.l.b16 %v426
        %v626 = vunpack.c.l.b16 %v427
        %v627 = vunpack.c.l.b16 %v428
        %v628 = vunpack.c.l.b16 %v429
        %v629 = vunpack.c.l.b16 %v430
        %v630 = vunpack.c.l.b16 %v431
        %v631 = vunpack.c.l.b16 %v432
        %v632 = vunpack.c.l.b16 %v433
        %v633 = vunpack.c.l.b16 %v434
        %v634 = vunpack.c.l.b16 %v435
        %v635 = vunpack.c.l.b16 %v436
        %v636 = vunpack.c.l.b16 %v437
        %v637 = vunpack.c.l.b16 %v438
        %v638 = vunpack.c.l.b16 %v439
        %v639 = vunpack.c.l.b16 %v440
        %v640 = vunpack.c.l.b16 %v441
        %v641 = vunpack.c.l.b16 %v442
        %v642 = vunpack.c.l.b16 %v443
        %v643 = vunpack.c.l.b16 %v444
        %v644 = vunpack.c.l.b16 %v445
        %v645 = vunpack.c.l.b16 %v446
        %v646 = vunpack.c.l.b16 %v447
        %v647 = vunpack.c.l.b16 %v448
        %v648 = vunpack.c.l.b16 %v449
        %v649 = vunpack.c.l.b16 %v450
        %v650 = vunpack.c.l.b16 %v451
        %v651 = vunpack.c.l.b16 %v452
        %v652 = vunpack.c.l.b16 %v453
        %v653 = vunpack.c.l.b16 %v454
        %v654 = vunpack.c.l.b16 %v455
        %v655 = vunpack.c.l.b16 %v456
        %v656 = vunpack.c.l.b16 %v457
        %v657 = vunpack.c.l.b16 %v458
        %v658 = vunpack.c.l.b16 %v459
        %v659 = vunpack.c.l.b16 %v460
        %v660 = vunpack.c.l.b16 %v461
        %v661 = vunpack.c.l.b16 %v462
        %v662 = vunpack.c.l.b16 %v463
        %v663 = vunpack.c.l.b16 %v464
        %v664 = vunpack.c.l.b16 %v465
        %v665 = vunpack.c.l.b16 %v466
        %v666 = vunpack.c.l.b16 %v467
        %v667 = vunpack.c.l.b16 %v468
        %v668 = vunpack.c.l.b16 %v469
        %v669 = vunpack.c.l.b16 %v470
        %v670 = vunpack.c.l.b16 %v471
        %v671 = vunpack.c.l.b16 %v472
        %v672 = vunpack.c.l.b16 %v473
        %v673 = vunpack.c.l.b16 %v474
        %v674 = vunpack.c.l.b16 %v475
        %v675 = vunpack.c.l.b16 %v476
        %v676 = vunpack.c.l.b16 %v477
        %v677 = vunpack.c.l.b16 %v478
        %v678 = vunpack.c.l.b16 %v479
        %v679 = vunpack.c.l.b16 %v480
        %v680 = vunpack.c.l.b16 %v481
        %v681 = vunpack.c.l.b16 %v482
        %v682 = vunpack.c.l.b16 %v483
        %v683 = vunpack.c.l.b16 %v484
        %v684 = vunpack.c.l.b16 %v485
        %v685 = vunpack.c.l.b16 %v486
        %v686 = vunpack.c.l.b16 %v487
        %v687 = vunpack.c.l.b16 %v488
        %v688 = vunpack.c.l.b16 %v489
        %v689 = vunpack.c.l.b16 %v490
        %v690 = vunpack.c.l.b16 %v491
        %v691 = vunpack.c.l.b16 %v492
        %v692 = vunpack.c.l.b16 %v493
        %v693 = vunpack.c.l.b16 %v494
        %v694 = vunpack.c.l.b16 %v495
        %v695 = vunpack.c.l.b16 %v496
        %v696 = vunpack.c.l.b16 %v497
        %v697 = vunpack.c.l.b16 %v498
        %v698 = vunpack.c.l.b16 %v499
        %v699 = vunpack.c.l.b16 %v500
        %v700 = vunpack.c.l.b16 %v501
        %v701 = vunpack.c.l.b16 %v502
        %v702 = vunpack.c.l.b16 %v503
        %v703 = vunpack.c.l.b16 %v504
        %v704 = vunpack.c.l.b16 %v505
        %v705 = vunpack.c.l.b16 %v506
        %v706 = vunpack.c.l.b16 %v507
        %v707 = vunpack.c.l.b16 %v508
        %v708 = vunpack.c.l.b16 %v509
        %v709 = vunpack.c.l.b16 %v510
        %v710 = vunpack.c.l.b16 %v511
        %v711 = vunpack.c.l.b16 %v512
        %v712 = vpack.c.b16 %v617, %v616
        %v713 = vpack.c.b16 %v619, %v618
        %v714 = vpack.c.b16 %v621, %v620
        %v715 = vpack.c.b16 %v623, %v622
        %v716 = vpack.c.b16 %v625, %v624
        %v717 = vpack.c.b16 %v627, %v626
        %v718 = vpack.c.b16 %v629, %v628
        %v719 = vpack.c.b16 %v631, %v630
        %v720 = vpack.c.b16 %v633, %v632
        %v721 = vpack.c.b16 %v635, %v634
        %v722 = vpack.c.b16 %v637, %v636
        %v723 = vpack.c.b16 %v639, %v638
        %v724 = vpack.c.b16 %v641, %v640
        %v725 = vpack.c.b16 %v643, %v642
        %v726 = vpack.c.b16 %v645, %v644
        %v727 = vpack.c.b16 %v647, %v646
        %v728 = vpack.c.b16 %v649, %v648
        %v729 = vpack.c.b16 %v651, %v650
        %v730 = vpack.c.b16 %v653, %v652
        %v731 = vpack.c.b16 %v655, %v654
        %v732 = vpack.c.b16 %v657, %v656
        %v733 = vpack.c.b16 %v659, %v658
        %v734 = vpack.c.b16 %v661, %v660
        %v735 = vpack.c.b16 %v663, %v662
        %v736 = vpack.c.b16 %v665, %v664
        %v737 = vpack.c.b16 %v667, %v666
        %v738 = vpack.c.b16 %v669, %v668
        %v739 = vpack.c.b16 %v671, %v670
        %v740 = vpack.c.b16 %v673, %v672
        %v741 = vpack.c.b16 %v675, %v674
        %v742 = vpack.c.b16 %v677, %v676
        %v743 = vpack.c.b16 %v679, %v678
        %v744 = vpack.c.b16 %v681, %v680
        %v745 = vpack.c.b16 %v683, %v682
        %v746 = vpack.c.b16 %v685, %v684
        %v747 = vpack.c.b16 %v687, %v686
        %v748 = vpack.c.b16 %v689, %v688
        %v749 = vpack.c.b16 %v691, %v690
        %v750 = vpack.c.b16 %v693, %v692
        %v751 = vpack.c.b16 %v695, %v694
        %v752 = vpack.c.b16 %v697, %v696
        %v753 = vpack.c.b16 %v699, %v698
        %v754 = vpack.c.b16 %v701, %v700
        %v755 = vpack.c.b16 %v703, %v702
        %v756 = vpack.c.b16 %v705, %v704
        %v757 = vpack.c.b16 %v707, %v706
        %v758 = vpack.c.b16 %v709, %v708
        %v759 = vpack.c.b16 %v711, %v710
        %808 = vmatprep.subr.bf16.mxu0 0
        %809 = vmatpush1.bf16.msra.mxu0 %v712
        %810 = vmatprep.subr.bf16.mxu0 0
        %811 = vmatpush1.bf16.msra.mxu0 %v713
        %812 = vmatprep.subr.bf16.mxu0 0
        %813 = vmatpush1.bf16.msra.mxu0 %v714
        %814 = vmatprep.subr.bf16.mxu0 0
        %815 = vmatpush1.bf16.msra.mxu0 %v715
        %816 = vmatprep.subr.bf16.mxu0 0
        %817 = vmatpush1.bf16.msra.mxu0 %v716
        %818 = vmatprep.subr.bf16.mxu0 0
        %819 = vmatpush1.bf16.msra.mxu0 %v717
        %820 = vmatprep.subr.bf16.mxu0 0
        %821 = vmatpush1.bf16.msra.mxu0 %v718
        %822 = vmatprep.subr.bf16.mxu0 0
        %823 = vmatpush1.bf16.msra.mxu0 %v719
        %824 = vmatprep.subr.bf16.mxu0 0
        %825 = vmatpush1.bf16.msra.mxu0 %v720
        %826 = vmatprep.subr.bf16.mxu0 0
        %827 = vmatpush1.bf16.msra.mxu0 %v721
        %828 = vmatprep.subr.bf16.mxu0 0
        %829 = vmatpush1.bf16.msra.mxu0 %v722
        %830 = vmatprep.subr.bf16.mxu0 0
        %831 = vmatpush1.bf16.msra.mxu0 %v723
        %832 = vmatprep.subr.bf16.mxu0 0
        %833 = vmatpush1.bf16.msra.mxu0 %v724
        %834 = vmatprep.subr.bf16.mxu0 0
        %835 = vmatpush1.bf16.msra.mxu0 %v725
        %836 = vmatprep.subr.bf16.mxu0 0
        %837 = vmatpush1.bf16.msra.mxu0 %v726
        %838 = vmatprep.subr.bf16.mxu0 0
        %839 = vmatpush1.bf16.msra.mxu0 %v727
        %840 = vmatprep.mubr.bf16.mxu0 %v370
        %841 = vmatmul.mubr.bf16.gmra.mrb[0].mxu0 %v369
        %v842 = vpop.f32.mrb[0].mxu0
        %v843 = vadd.f32 %v518, %v842
        %v844 = vpop.f32.mrb[0].mxu0
        %v845 = vpop.f32.mrb[0].mxu0
        %v846 = vadd.f32 %v518, %v845
        %v847 = vpop.f32.mrb[0].mxu0
        %848 = vmatprep.mubr.bf16.mxu0 %v376
        %849 = vmatmul.mubr.bf16.gmra.mrb[0].mxu0 %v375
        %v850 = vpop.f32.mrb[0].mxu0
        %v851 = vadd.f32 %v518, %v850
        %v852 = vpop.f32.mrb[0].mxu0
        %v853 = vpop.f32.mrb[0].mxu0
        %v854 = vadd.f32 %v518, %v853
        %v855 = vpop.f32.mrb[0].mxu0
        %856 = vmatprep.mubr.bf16.mxu0 %v382
        %857 = vmatmul.mubr.bf16.gmra.mrb[0].mxu0 %v381
        %v858 = vpop.f32.mrb[0].mxu0
        %v859 = vadd.f32 %v518, %v858
        %v860 = vpop.f32.mrb[0].mxu0
        %v861 = vpop.f32.mrb[0].mxu0
        %v862 = vadd.f32 %v518, %v861
        %v863 = vpop.f32.mrb[0].mxu0
        %864 = vmatprep.mubr.bf16.mxu0 %v388
        %865 = vmatmul.mubr.bf16.gmra.mrb[0].mxu0 %v387
        %v866 = vpop.f32.mrb[0].mxu0
        %v867 = vadd.f32 %v518, %v866
        %v868 = vpop.f32.mrb[0].mxu0
        %v869 = vpop.f32.mrb[0].mxu0
        %v870 = vadd.f32 %v518, %v869
        %v871 = vpop.f32.mrb[0].mxu0
        %872 = vmatprep.mubr.bf16.mxu0 %v394
        %873 = vmatmul.mubr.bf16.gmra.mrb[0].mxu0 %v393
        %v874 = vpop.f32.mrb[0].mxu0
        %v875 = vadd.f32 %v518, %v874
        %v876 = vpop.f32.mrb[0].mxu0
        %v877 = vpop.f32.mrb[0].mxu0
        %v878 = vadd.f32 %v518, %v877
        %v879 = vpop.f32.mrb[0].mxu0
        %880 = vmatprep.mubr.bf16.mxu0 %v400
        %881 = vmatmul.mubr.bf16.gmra.mrb[0].mxu0 %v399
        %v882 = vpop.f32.mrb[0].mxu0
        %v883 = vadd.f32 %v518, %v882
        %v884 = vpop.f32.mrb[0].mxu0
        %v885 = vpop.f32.mrb[0].mxu0
        %v886 = vadd.f32 %v518, %v885
        %v887 = vpop.f32.mrb[0].mxu0
        %888 = vmatprep.mubr.bf16.mxu0 %v406
        %889 = vmatmul.mubr.bf16.gmra.mrb[0].mxu0 %v405
        %v890 = vpop.f32.mrb[0].mxu0
        %v891 = vadd.f32 %v518, %v890
        %v892 = vpop.f32.mrb[0].mxu0
        %v893 = vpop.f32.mrb[0].mxu0
        %v894 = vadd.f32 %v518, %v893
        %v895 = vpop.f32.mrb[0].mxu0
        %896 = vmatprep.mubr.bf16.mxu0 %v412
        %897 = vmatmul.mubr.bf16.gmra.mrb[0].mxu0 %v411
        %v898 = vpop.f32.mrb[0].mxu0
        %v899 = vadd.f32 %v518, %v898
        %v900 = vpop.f32.mrb[0].mxu0
        %v901 = vpop.f32.mrb[0].mxu0
        %v902 = vadd.f32 %v518, %v901
        %v903 = vpop.f32.mrb[0].mxu0
        %904 = vdwg.mxu0
        %905 = vmatprep.subr.bf16.mxu0 0
        %906 = vmatpush1.bf16.msra.mxu0 %v728
        %907 = vmatprep.subr.bf16.mxu0 0
        %908 = vmatpush1.bf16.msra.mxu0 %v729
        %909 = vmatprep.subr.bf16.mxu0 0
        %910 = vmatpush1.bf16.msra.mxu0 %v730
        %911 = vmatprep.subr.bf16.mxu0 0
        %912 = vmatpush1.bf16.msra.mxu0 %v731
        %913 = vmatprep.subr.bf16.mxu0 0
        %914 = vmatpush1.bf16.msra.mxu0 %v732
        %915 = vmatprep.subr.bf16.mxu0 0
        %916 = vmatpush1.bf16.msra.mxu0 %v733
        %917 = vmatprep.subr.bf16.mxu0 0
        %918 = vmatpush1.bf16.msra.mxu0 %v734
        %919 = vmatprep.subr.bf16.mxu0 0
        %920 = vmatpush1.bf16.msra.mxu0 %v735
        %921 = vmatprep.subr.bf16.mxu0 0
        %922 = vmatpush1.bf16.msra.mxu0 %v736
        %923 = vmatprep.subr.bf16.mxu0 0
        %924 = vmatpush1.bf16.msra.mxu0 %v737
        %925 = vmatprep.subr.bf16.mxu0 0
        %926 = vmatpush1.bf16.msra.mxu0 %v738
        %927 = vmatprep.subr.bf16.mxu0 0
        %928 = vmatpush1.bf16.msra.mxu0 %v739
        %929 = vmatprep.subr.bf16.mxu0 0
        %930 = vmatpush1.bf16.msra.mxu0 %v740
        %931 = vmatprep.subr.bf16.mxu0 0
        %932 = vmatpush1.bf16.msra.mxu0 %v741
        %933 = vmatprep.subr.bf16.mxu0 0
        %934 = vmatpush1.bf16.msra.mxu0 %v742
        %935 = vmatprep.subr.bf16.mxu0 0
        %936 = vmatpush1.bf16.msra.mxu0 %v743
        %937 = vmatprep.mubr.bf16.mxu0 %v372
        %938 = vmatmul.mubr.bf16.gmra.mrb[0].mxu0 %v371
        %v939 = vpop.f32.mrb[0].mxu0
        %v940 = vadd.f32 %v843, %v939
        %v941 = vpop.f32.mrb[0].mxu0
        %v942 = vpop.f32.mrb[0].mxu0
        %v943 = vadd.f32 %v846, %v942
        %v944 = vpop.f32.mrb[0].mxu0
        %945 = vmatprep.mubr.bf16.mxu0 %v378
        %946 = vmatmul.mubr.bf16.gmra.mrb[0].mxu0 %v377
        %v947 = vpop.f32.mrb[0].mxu0
        %v948 = vadd.f32 %v851, %v947
        %v949 = vpop.f32.mrb[0].mxu0
        %v950 = vpop.f32.mrb[0].mxu0
        %v951 = vadd.f32 %v854, %v950
        %v952 = vpop.f32.mrb[0].mxu0
        %953 = vmatprep.mubr.bf16.mxu0 %v384
        %954 = vmatmul.mubr.bf16.gmra.mrb[0].mxu0 %v383
        %v955 = vpop.f32.mrb[0].mxu0
        %v956 = vadd.f32 %v859, %v955
        %v957 = vpop.f32.mrb[0].mxu0
        %v958 = vpop.f32.mrb[0].mxu0
        %v959 = vadd.f32 %v862, %v958
        %v960 = vpop.f32.mrb[0].mxu0
        %961 = vmatprep.mubr.bf16.mxu0 %v390
        %962 = vmatmul.mubr.bf16.gmra.mrb[0].mxu0 %v389
        %v963 = vpop.f32.mrb[0].mxu0
        %v964 = vadd.f32 %v867, %v963
        %v965 = vpop.f32.mrb[0].mxu0
        %v966 = vpop.f32.mrb[0].mxu0
        %v967 = vadd.f32 %v870, %v966
        %v968 = vpop.f32.mrb[0].mxu0
        %969 = vmatprep.mubr.bf16.mxu0 %v396
        %970 = vmatmul.mubr.bf16.gmra.mrb[0].mxu0 %v395
        %v971 = vpop.f32.mrb[0].mxu0
        %v972 = vadd.f32 %v875, %v971
        %v973 = vpop.f32.mrb[0].mxu0
        %v974 = vpop.f32.mrb[0].mxu0
        %v975 = vadd.f32 %v878, %v974
        %v976 = vpop.f32.mrb[0].mxu0
        %977 = vmatprep.mubr.bf16.mxu0 %v402
        %978 = vmatmul.mubr.bf16.gmra.mrb[0].mxu0 %v401
        %v979 = vpop.f32.mrb[0].mxu0
        %v980 = vadd.f32 %v883, %v979
        %v981 = vpop.f32.mrb[0].mxu0
        %v982 = vpop.f32.mrb[0].mxu0
        %v983 = vadd.f32 %v886, %v982
        %v984 = vpop.f32.mrb[0].mxu0
        %985 = vmatprep.mubr.bf16.mxu0 %v408
        %986 = vmatmul.mubr.bf16.gmra.mrb[0].mxu0 %v407
        %v987 = vpop.f32.mrb[0].mxu0
        %v988 = vadd.f32 %v891, %v987
        %v989 = vpop.f32.mrb[0].mxu0
        %v990 = vpop.f32.mrb[0].mxu0
        %v991 = vadd.f32 %v894, %v990
        %v992 = vpop.f32.mrb[0].mxu0
        %993 = vmatprep.mubr.bf16.mxu0 %v414
        %994 = vmatmul.mubr.bf16.gmra.mrb[0].mxu0 %v413
        %v995 = vpop.f32.mrb[0].mxu0
        %v996 = vadd.f32 %v899, %v995
        %v997 = vpop.f32.mrb[0].mxu0
        %v998 = vpop.f32.mrb[0].mxu0
        %v999 = vadd.f32 %v902, %v998
        %v1000 = vpop.f32.mrb[0].mxu0
        %1001 = vdwg.mxu0
        %1002 = vmatprep.subr.bf16.mxu0 0
        %1003 = vmatpush1.bf16.msra.mxu0 %v744
        %1004 = vmatprep.subr.bf16.mxu0 0
        %1005 = vmatpush1.bf16.msra.mxu0 %v745
        %1006 = vmatprep.subr.bf16.mxu0 0
        %1007 = vmatpush1.bf16.msra.mxu0 %v746
        %1008 = vmatprep.subr.bf16.mxu0 0
        %1009 = vmatpush1.bf16.msra.mxu0 %v747
        %1010 = vmatprep.subr.bf16.mxu0 0
        %1011 = vmatpush1.bf16.msra.mxu0 %v748
        %1012 = vmatprep.subr.bf16.mxu0 0
        %1013 = vmatpush1.bf16.msra.mxu0 %v749
        %1014 = vmatprep.subr.bf16.mxu0 0
        %1015 = vmatpush1.bf16.msra.mxu0 %v750
        %1016 = vmatprep.subr.bf16.mxu0 0
        %1017 = vmatpush1.bf16.msra.mxu0 %v751
        %1018 = vmatprep.subr.bf16.mxu0 0
        %1019 = vmatpush1.bf16.msra.mxu0 %v752
        %1020 = vmatprep.subr.bf16.mxu0 0
        %1021 = vmatpush1.bf16.msra.mxu0 %v753
        %1022 = vmatprep.subr.bf16.mxu0 0
        %1023 = vmatpush1.bf16.msra.mxu0 %v754
        %1024 = vmatprep.subr.bf16.mxu0 0
        %1025 = vmatpush1.bf16.msra.mxu0 %v755
        %1026 = vmatprep.subr.bf16.mxu0 0
        %1027 = vmatpush1.bf16.msra.mxu0 %v756
        %1028 = vmatprep.subr.bf16.mxu0 0
        %1029 = vmatpush1.bf16.msra.mxu0 %v757
        %1030 = vmatprep.subr.bf16.mxu0 0
        %1031 = vmatpush1.bf16.msra.mxu0 %v758
        %1032 = vmatprep.subr.bf16.mxu0 0
        %1033 = vmatpush1.bf16.msra.mxu0 %v759
        %1034 = vmatprep.mubr.bf16.mxu0 %v374
        %1035 = vmatmul.mubr.bf16.gmra.mrb[0].mxu0 %v373
        %v1036 = vpop.f32.mrb[0].mxu0
        %v1037 = vadd.f32 %v940, %v1036
        %v1038 = vpop.f32.mrb[0].mxu0
        %v1039 = vpop.f32.mrb[0].mxu0
        %v1040 = vadd.f32 %v943, %v1039
        %v1041 = vpop.f32.mrb[0].mxu0
        %1042 = vmatprep.mubr.bf16.mxu0 %v380
        %1043 = vmatmul.mubr.bf16.gmra.mrb[0].mxu0 %v379
        %v1044 = vpop.f32.mrb[0].mxu0
        %v1045 = vadd.f32 %v948, %v1044
        %v1046 = vpop.f32.mrb[0].mxu0
        %v1047 = vpop.f32.mrb[0].mxu0
        %v1048 = vadd.f32 %v951, %v1047
        %v1049 = vpop.f32.mrb[0].mxu0
        %1050 = vmatprep.mubr.bf16.mxu0 %v386
        %1051 = vmatmul.mubr.bf16.gmra.mrb[0].mxu0 %v385
        %v1052 = vpop.f32.mrb[0].mxu0
        %v1053 = vadd.f32 %v956, %v1052
        %v1054 = vpop.f32.mrb[0].mxu0
        %v1055 = vpop.f32.mrb[0].mxu0
        %v1056 = vadd.f32 %v959, %v1055
        %v1057 = vpop.f32.mrb[0].mxu0
        %1058 = vmatprep.mubr.bf16.mxu0 %v392
        %1059 = vmatmul.mubr.bf16.gmra.mrb[0].mxu0 %v391
        %v1060 = vpop.f32.mrb[0].mxu0
        %v1061 = vadd.f32 %v964, %v1060
        %v1062 = vpop.f32.mrb[0].mxu0
        %v1063 = vpop.f32.mrb[0].mxu0
        %v1064 = vadd.f32 %v967, %v1063
        %v1065 = vpop.f32.mrb[0].mxu0
        %1066 = vmatprep.mubr.bf16.mxu0 %v398
        %1067 = vmatmul.mubr.bf16.gmra.mrb[0].mxu0 %v397
        %v1068 = vpop.f32.mrb[0].mxu0
        %v1069 = vadd.f32 %v972, %v1068
        %v1070 = vpop.f32.mrb[0].mxu0
        %v1071 = vpop.f32.mrb[0].mxu0
        %v1072 = vadd.f32 %v975, %v1071
        %v1073 = vpop.f32.mrb[0].mxu0
        %1074 = vmatprep.mubr.bf16.mxu0 %v404
        %1075 = vmatmul.mubr.bf16.gmra.mrb[0].mxu0 %v403
        %v1076 = vpop.f32.mrb[0].mxu0
        %v1077 = vadd.f32 %v980, %v1076
        %v1078 = vpop.f32.mrb[0].mxu0
        %v1079 = vpop.f32.mrb[0].mxu0
        %v1080 = vadd.f32 %v983, %v1079
        %v1081 = vpop.f32.mrb[0].mxu0
        %1082 = vmatprep.mubr.bf16.mxu0 %v410
        %1083 = vmatmul.mubr.bf16.gmra.mrb[0].mxu0 %v409
        %v1084 = vpop.f32.mrb[0].mxu0
        %v1085 = vadd.f32 %v988, %v1084
        %v1086 = vpop.f32.mrb[0].mxu0
        %v1087 = vpop.f32.mrb[0].mxu0
        %v1088 = vadd.f32 %v991, %v1087
        %v1089 = vpop.f32.mrb[0].mxu0
        %1090 = vmatprep.mubr.bf16.mxu0 %v416
        %1091 = vmatmul.mubr.bf16.gmra.mrb[0].mxu0 %v415
        %v1092 = vpop.f32.mrb[0].mxu0
        %v1093 = vadd.f32 %v996, %v1092
        %v1094 = vpop.f32.mrb[0].mxu0
        %v1095 = vpop.f32.mrb[0].mxu0
        %v1096 = vadd.f32 %v999, %v1095
        %v1097 = vpop.f32.mrb[0].mxu0
        %1098 = vdwg.mxu0
        %v1099 = vmul.f32 %v1037, 0.5
        %v1100 = vmul.f32 %v1040, 0.5
        %v1101 = vmul.f32 %v1045, 0.5
        %v1102 = vmul.f32 %v1048, 0.5
        %v1103 = vmul.f32 %v1053, 0.5
        %v1104 = vmul.f32 %v1056, 0.5
        %v1105 = vmul.f32 %v1061, 0.5
        %v1106 = vmul.f32 %v1064, 0.5
        %v1107 = vmul.f32 %v1069, 0.5
        %v1108 = vmul.f32 %v1072, 0.5
        %v1109 = vmul.f32 %v1077, 0.5
        %v1110 = vmul.f32 %v1080, 0.5
        %v1111 = vmul.f32 %v1085, 0.5
        %v1112 = vmul.f32 %v1088, 0.5
        %v1113 = vmul.f32 %v1093, 0.5
        %v1114 = vmul.f32 %v1096, 0.5
        %v1115 = vmul.f32 %v1037, 0.70710677
        %v1116 = vmul.f32 %v1040, 0.70710677
        %v1117 = vmul.f32 %v1045, 0.70710677
        %v1118 = vmul.f32 %v1048, 0.70710677
        %v1119 = vmul.f32 %v1053, 0.70710677
        %v1120 = vmul.f32 %v1056, 0.70710677
        %v1121 = vmul.f32 %v1061, 0.70710677
        %v1122 = vmul.f32 %v1064, 0.70710677
        %v1123 = vmul.f32 %v1069, 0.70710677
        %v1124 = vmul.f32 %v1072, 0.70710677
        %v1125 = vmul.f32 %v1077, 0.70710677
        %v1126 = vmul.f32 %v1080, 0.70710677
        %v1127 = vmul.f32 %v1085, 0.70710677
        %v1128 = vmul.f32 %v1088, 0.70710677
        %v1129 = vmul.f32 %v1093, 0.70710677
        %v1130 = vmul.f32 %v1096, 0.70710677
        %v1131 = verf.f32.pop %v1115
        %v1132 = verf.f32.pop %v1116
        %v1133 = verf.f32.pop %v1117
        %v1134 = verf.f32.pop %v1118
        %v1135 = verf.f32.pop %v1119
        %v1136 = verf.f32.pop %v1120
        %v1137 = verf.f32.pop %v1121
        %v1138 = verf.f32.pop %v1122
        %v1139 = verf.f32.pop %v1123
        %v1140 = verf.f32.pop %v1124
        %v1141 = verf.f32.pop %v1125
        %v1142 = verf.f32.pop %v1126
        %v1143 = verf.f32.pop %v1127
        %v1144 = verf.f32.pop %v1128
        %v1145 = verf.f32.pop %v1129
        %v1146 = verf.f32.pop %v1130
        %v1147 = vadd.f32 %v1131, 1.0
        %v1148 = vadd.f32 %v1132, 1.0
        %v1149 = vadd.f32 %v1133, 1.0
        %v1150 = vadd.f32 %v1134, 1.0
        %v1151 = vadd.f32 %v1135, 1.0
        %v1152 = vadd.f32 %v1136, 1.0
        %v1153 = vadd.f32 %v1137, 1.0
        %v1154 = vadd.f32 %v1138, 1.0
        %v1155 = vadd.f32 %v1139, 1.0
        %v1156 = vadd.f32 %v1140, 1.0
        %v1157 = vadd.f32 %v1141, 1.0
        %v1158 = vadd.f32 %v1142, 1.0
        %v1159 = vadd.f32 %v1143, 1.0
        %v1160 = vadd.f32 %v1144, 1.0
        %v1161 = vadd.f32 %v1145, 1.0
        %v1162 = vadd.f32 %v1146, 1.0
        %v1163 = vmul.f32 %v1099, %v1147
        %v1164 = vmul.f32 %v1100, %v1148
        %v1165 = vmul.f32 %v1101, %v1149
        %v1166 = vmul.f32 %v1102, %v1150
        %v1167 = vmul.f32 %v1103, %v1151
        %v1168 = vmul.f32 %v1104, %v1152
        %v1169 = vmul.f32 %v1105, %v1153
        %v1170 = vmul.f32 %v1106, %v1154
        %v1171 = vmul.f32 %v1107, %v1155
        %v1172 = vmul.f32 %v1108, %v1156
        %v1173 = vmul.f32 %v1109, %v1157
        %v1174 = vmul.f32 %v1110, %v1158
        %v1175 = vmul.f32 %v1111, %v1159
        %v1176 = vmul.f32 %v1112, %v1160
        %v1177 = vmul.f32 %v1113, %v1161
        %v1178 = vmul.f32 %v1114, %v1162
        %v1179 = vpack.c.bf16 %v1164, %v1163
        %v1180 = vpack.c.bf16 %v1166, %v1165
        %v1181 = vpack.c.bf16 %v1168, %v1167
        %v1182 = vpack.c.bf16 %v1170, %v1169
        %v1183 = vpack.c.bf16 %v1172, %v1171
        %v1184 = vpack.c.bf16 %v1174, %v1173
        %v1185 = vpack.c.bf16 %v1176, %v1175
        %v1186 = vpack.c.bf16 %v1178, %v1177
        %v1187 = vld [vmem:[#allocation7] sm:$0xf]
        %v1188 = vld [vmem:[#allocation7 + $0x4] sm:$0xf]
        %v1189 = vld [vmem:[%s4] sm:$0xff]
        %v1190 = vld [vmem:[%s4 + $0x8] sm:$0xff]
        %1192 = vset.pattern.permute.xlu0 0
        %1193 = vperm.xlu0 %1192, %v1189
        %v1194 = vpop.permute.xlu0 %1193
        %1197 = vset.pattern.permute.xlu0 0
        %1198 = vperm.xlu0 %1197, %v1190
        %v1199 = vpop.permute.xlu0 %1198
        %v1203 = vunpack.c.l.b16 %v1187
        %v1204 = vunpack.c.l.b16 %v1188
        %v1205 = vpack.c.b16 %v1204, %v1203
        %vm1206 = vcmask 261120
        %v1208 = vsel %vm1206, %v1205, 0
        %v1211 = vsel %vm1206, %v1179, 0
        %v1214 = vsel %vm1206, %v1180, 0
        %v1217 = vsel %vm1206, %v1181, 0
        %v1220 = vsel %vm1206, %v1182, 0
        %v1223 = vsel %vm1206, %v1183, 0
        %v1226 = vsel %vm1206, %v1184, 0
        %v1229 = vsel %vm1206, %v1185, 0
        %v1232 = vsel %vm1206, %v1186, 0
        %1234 = vmatprep.subr.bf16.mxu0 0
        %1235 = vmatpush1.bf16.xpose.msra.mxu0 %v1211
        %1236 = vmatprep.subr.bf16.mxu0 0
        %1237 = vmatpush1.bf16.xpose.msra.mxu0 %v1214
        %1238 = vmatprep.subr.bf16.mxu0 0
        %1239 = vmatpush1.bf16.xpose.msra.mxu0 %v1217
        %1240 = vmatprep.subr.bf16.mxu0 0
        %1241 = vmatpush1.bf16.xpose.msra.mxu0 %v1220
        %1242 = vmatprep.subr.bf16.mxu0 0
        %1243 = vmatpush1.bf16.xpose.msra.mxu0 %v1223
        %1244 = vmatprep.subr.bf16.mxu0 0
        %1245 = vmatpush1.bf16.xpose.msra.mxu0 %v1226
        %1246 = vmatprep.subr.bf16.mxu0 0
        %1247 = vmatpush1.bf16.xpose.msra.mxu0 %v1229
        %1248 = vmatprep.subr.bf16.mxu0 0
        %1249 = vmatpush1.bf16.xpose.msra.mxu0 %v1232
        %1250 = vmatprep.subr.bf16.mxu0 0
        %1251 = vmatpush1.bf16.xpose.msra.mxu0 0
        %1252 = vmatprep.subr.bf16.mxu0 0
        %1253 = vmatpush1.bf16.xpose.msra.mxu0 0
        %1254 = vmatprep.subr.bf16.mxu0 0
        %1255 = vmatpush1.bf16.xpose.msra.mxu0 0
        %1256 = vmatprep.subr.bf16.mxu0 0
        %1257 = vmatpush1.bf16.xpose.msra.mxu0 0
        %1258 = vmatprep.subr.bf16.mxu0 0
        %1259 = vmatpush1.bf16.xpose.msra.mxu0 0
        %1260 = vmatprep.subr.bf16.mxu0 0
        %1261 = vmatpush1.bf16.xpose.msra.mxu0 0
        %1262 = vmatprep.subr.bf16.mxu0 0
        %1263 = vmatpush1.bf16.xpose.msra.mxu0 0
        %1264 = vmatprep.subr.bf16.mxu0 0
        %1265 = vmatpush1.bf16.xpose.msra.mxu0 0
        %1266 = vmatprep.mubr.bf16.mxu0 0
        %1267 = vmatmul.mubr.bf16.gmra.mrb[0].mxu0 %v1208
        %v1268 = vpop.f32.mrb[0].mxu0
        %v1269 = vadd.f32 %v1194, %v1268
        %v1270 = vpop.f32.mrb[0].mxu0
        %v1271 = vpop.f32.mrb[0].mxu0
        %v1272 = vadd.f32 %v1199, %v1271
        %v1273 = vpop.f32.mrb[0].mxu0
        %1274 = vdwg.mxu0
        %1275 = vst [vmem:[%s270] sm:$0xff] %v1269
        %1276 = vst [vmem:[%s270 + $0x8] sm:$0xff] %v1272
        %s1277 = sand.u32 %s141, 1
        %s1278 = scalar_lea.sflag [#allocation4], %s1277
        %s1279 = sand.u32 %s141, 1
        %s1280 = smul.addr %s1279, 16
        %s1281 = scalar_lea.vmem [#allocation8], %s1280
        // Predicated region
        $region53: #{tpu_custom_call.1} parent=39 // pred_check
          %p1282 = pneg %p151
        $region54: #{tpu_custom_call.1} parent=39 // pred_check_branch
          %1284 = sbr.rel (%p1282) target = $region56
        $region55: #{tpu_custom_call.1} parent=39 // pred_region
          %s1286 = ssub.s32 256, 256
          %1287 = vsyncadd %s1278, %s1286
          %s1288 = smul.addr %s23, 128
          %s1289 = scalar_lea.hbm %s5, %s1288
          %s1290 = sshll.u32 %s1281, 4
          %s1291 = int_to_ptr.vmem [resolvable:$true] %s1290
          %1296 = dma.vmem_to_hbm [thread:$0]  %s1291, 256, %s1289, %s1278, 128, 512, 8
        $region56: #{tpu_custom_call.1} parent=39 // pred_fallthru
          _
      $region40: #{tpu_custom_call.1} parent=5 // pred_fallthru
        _
      %p1297 = scmp.le.s32.totalorder 2, %s18
      // Predicated region
      $region57: #{tpu_custom_call.1} parent=5 // pred_check
        %p1298 = pneg %p1297
      $region58: #{tpu_custom_call.1} parent=5 // pred_check_branch
        %1300 = sbr.rel (%p1298) target = $region60
      $region59: #{tpu_custom_call.1} parent=5 // pred_region
        %s1301 = ssub.s32 %s18, 2
        // Predicated region
        $region61: #{tpu_custom_call.1} parent=59 // pred_check
          %p1302 = pneg %p157
        $region62: #{tpu_custom_call.1} parent=59 // pred_check_branch
          %1304 = sbr.rel (%p1302) target = $region64
        $region63: #{tpu_custom_call.1} parent=59 // pred_region
          %s1305 = sand.u32 %s142, 1
          %s1306 = scalar_lea.sflag [#allocation4], %s1305
          %s1307 = sand.u32 %s142, 1
          %s1308 = smul.addr %s1307, 16
          %s1309 = scalar_lea.vmem [#allocation8], %s1308
          %1310 = dma.done %s1306, 256
        $region64: #{tpu_custom_call.1} parent=59 // pred_fallthru
          _
      $region60: #{tpu_custom_call.1} parent=5 // pred_fallthru
        _
    $region6: #{tpu_custom_call.1} parent=1 // loop_footer
      %s22 = sadd.s32 1, %s18
    $region7: #{tpu_custom_call.1} parent=1 // loop_footer_branch
      %17 = sbr.rel target = $region3
    $region8: #{tpu_custom_call.1} parent=1 // loop_exit
      _
    %1311 = vsyncpa [#allocation3], 1
    %s1312 = scalar_lea.sflag [#allocation3], 1
    %1313 = vsyncpa %s1312, 1
    %1314 = vsyncpa [#allocation6], 1
    %1315 = vsyncpa [#allocation4], 1
    %s1316 = scalar_lea.sflag [#allocation4], 1
    %1317 = vsyncpa %s1316, 1

</llo_original>
